<compile_context>
chip_gen: v7x
topology: tpu7x:2x2x1
jax: 0.10.0
libtpu: 0.0.40
codegen_flags: <defaults>
</compile_context>

<pallas_src>
import functools

import jax
import jax.numpy as jnp
from jax.experimental import pallas as pl
from jax.experimental.pallas import tpu as pltpu


def mlp_kernel(x_ref, w1_ref, b1_ref, w2_ref, b2_ref, w3_ref, b3_ref, o_ref):
    # x arrives as f32; cast to bf16 on the VPU (no extra wrapper HBM pass).
    x = x_ref[...].astype(jnp.bfloat16)

    # Layer 1: bf16 MXU matmul, f32 accumulate; bias/ReLU stay f32
    # (v5e VPU has no bf16 path).
    h1 = jnp.dot(x, w1_ref[...], preferred_element_type=jnp.float32) + b1_ref[...]
    h1 = jnp.maximum(h1, 0.0)

    # Layer 2: cast the f32 activation to bf16 only for the MXU operand.
    h2 = jnp.dot(h1.astype(jnp.bfloat16), w2_ref[...],
                 preferred_element_type=jnp.float32) + b2_ref[...]
    h2 = jnp.maximum(h2, 0.0)

    # Layer 3 (out_features == 1): VPU multiply + XLU lane reduction instead of
    # an N=1 MXU matmul.  w3_ref is a (1, d_h) f32 row broadcast over the tile.
    logits_col = jnp.sum(h2 * w3_ref[...], axis=-1, keepdims=True)      # (TB, 1)

    # Lane-dense epilogue: move the batch into lanes (XLU transpose, idle slot),
    # then sigmoid + store on (1, TB) -> unmasked lane-dense vst.
    logits_row = jnp.transpose(logits_col) + b3_ref[...]                 # (1, TB)
    o_ref[...] = jax.nn.sigmoid(logits_row)


@functools.partial(jax.jit, static_argnames=("tb",))
def feed_forward_nn(x, params, *, tb=2048):
    """x: (B, d_in) float32 -> (B,) float32 (matches torch forward().squeeze(1))."""
    w1, b1, w2, b2, w3_row, b3 = params
    B, d_in = x.shape
    d_h = w1.shape[1]

    if tb % 128 != 0:
        raise ValueError("tb must be a multiple of 128 (lane-dense output tile)")

    # Lane-dense output tile => TB must be a multiple of 128.  2048 default keeps
    # double-buffered x tiles ~2 MiB (trivial even under v7x's 32 MiB scoped VMEM
    # default) while amortizing the ~0.35 us per-grid-step overhead; for very
    # large B the grid naturally has >= 2 steps for megacore sharding.
    TB = min(tb, pl.cdiv(B, 128) * 128)
    num_tiles = pl.cdiv(B, TB)        # ragged last x tile handled by Pallas
    Bp = num_tiles * TB

    # Only the tiny weights are pre-cast (one-time, KB-scale); x stays f32 in HBM
    # and is cast to bf16 on the VPU inside the kernel.
    w1_bf = w1.astype(jnp.bfloat16)
    w2_bf = w2.astype(jnp.bfloat16)

    const = lambda i: (0, 0)  # resident weight/bias blocks (VMEM across the grid)

    out = pl.pallas_call(
        mlp_kernel,
        out_shape=jax.ShapeDtypeStruct((1, Bp), jnp.float32),
        grid=(num_tiles,),
        in_specs=[
            pl.BlockSpec((TB, d_in), lambda i: (i, 0)),   # x tile (pipelined, f32)
            pl.BlockSpec((d_in, d_h), const),             # W1 (bf16)
            pl.BlockSpec((1, d_h), const),                # b1 (f32)
            pl.BlockSpec((d_h, d_h), const),              # W2 (bf16)
            pl.BlockSpec((1, d_h), const),                # b2 (f32)
            pl.BlockSpec((1, d_h), const),                # w3 row (f32)
            pl.BlockSpec((1, 1), const),                  # b3 (f32)
        ],
        out_specs=pl.BlockSpec((1, TB), lambda i: (0, i)),  # lane-dense output row
        compiler_params=pltpu.CompilerParams(
            dimension_semantics=("parallel",),            # v7x: 2 TCs share batch
        ),
    )(x, w1_bf, b1, w2_bf, b2, w3_row, b3)

    # squeeze(1) + drop ragged-tile tail: (1, Bp) -> (B,)
    return out[0, :B]


def init_params(key, d_in, d_h=32):
    """Deterministic synthetic init (shapes match the module's nn.Linear layers).

    W1/W2 stored as (in, out) = transpose of nn.Linear.weight so the kernel
    computes y = x @ W + b; the third layer is kept as a (1, d_h) row
    (same layout as nn.Linear(d_h, 1).weight)."""
    k1, k2, k3, k4, k5, k6 = jax.random.split(key, 6)
    s1 = 1.0 / jnp.sqrt(d_in)
    s2 = 1.0 / jnp.sqrt(d_h)
    w1 = jax.random.uniform(k1, (d_in, d_h), jnp.float32, -s1, s1)
    b1 = jax.random.uniform(k2, (1, d_h), jnp.float32, -s1, s1)
    w2 = jax.random.uniform(k3, (d_h, d_h), jnp.float32, -s2, s2)
    b2 = jax.random.uniform(k4, (1, d_h), jnp.float32, -s2, s2)
    w3_row = jax.random.uniform(k5, (1, d_h), jnp.float32, -s2, s2)
    b3 = jax.random.uniform(k6, (1, 1), jnp.float32, -s2, s2)
    return (w1, b1, w2, b2, w3_row, b3)


def reference_forward(x, params):
    """Pure-JAX f32 reference of the torch module."""
    w1, b1, w2, b2, w3_row, b3 = params
    h1 = jnp.maximum(x @ w1 + b1, 0.0)
    h2 = jnp.maximum(h1 @ w2 + b2, 0.0)
    logits = h2 @ w3_row.T + b3
    return jax.nn.sigmoid(logits)[:, 0]


if __name__ == "__main__":
    d_in, d_h = 16, 32
    key = jax.random.PRNGKey(0)
    k_x, k_p, k_x2 = jax.random.split(key, 3)
    params = init_params(k_p, d_in, d_h)

    # Case 1: B=256 -> single exact lane-dense tile (TB=256).
    x_small = jax.random.normal(k_x, (256, d_in), jnp.float32)
    y_small = jax.block_until_ready(feed_forward_nn(x_small, params))
    y_small_ref = reference_forward(x_small, params)
    assert y_small.shape == (256,)
    # bf16 MXU inputs with f32 accumulation -> loosen tolerance vs f32 reference.
    assert jnp.allclose(y_small, y_small_ref, atol=2e-2, rtol=2e-2)

    # Case 2: B=600, tb=256 -> 3-step grid with a ragged last x tile (88 rows);
    # exercises multi-tile pipelining + lane-dense output slicing.
    x_big = jax.random.normal(k_x2, (600, d_in), jnp.float32)
    y_big = jax.block_until_ready(feed_forward_nn(x_big, params, tb=256))
    y_big_ref = reference_forward(x_big, params)
    assert y_big.shape == (600,)
    assert jnp.allclose(y_big, y_big_ref, atol=2e-2, rtol=2e-2)

    print("KERNEL_OK")
</pallas_src>

<mosaic_0001>
module attributes {stable_mosaic.version = 11 : i64} {
  func.func @mlp_kernel(%arg0: i32, %arg1: memref<256x16xf32, #tpu.memory_space<vmem>>, %arg2: memref<16x32xbf16, #tpu.memory_space<vmem>>, %arg3: memref<1x32xf32, #tpu.memory_space<vmem>>, %arg4: memref<32x32xbf16, #tpu.memory_space<vmem>>, %arg5: memref<1x32xf32, #tpu.memory_space<vmem>>, %arg6: memref<1x32xf32, #tpu.memory_space<vmem>>, %arg7: memref<1x1xf32, #tpu.memory_space<vmem>>, %arg8: memref<1x256xf32, #tpu.memory_space<vmem>>) attributes {dimension_semantics = [#tpu.dimension_semantics<parallel>], iteration_bounds = array<i64: 1>, scalar_prefetch = 0 : i64, scratch_operands = 0 : i64, tpu.core_type = #tpu.core_type<tc>, window_params = [{transform_indices = @transform_0, window_bounds = array<i64: 256, 16>}, {pipeline_mode = #tpu.pipeline_mode<synchronous>, transform_indices = @transform_1, window_bounds = array<i64: 16, 32>}, {pipeline_mode = #tpu.pipeline_mode<synchronous>, transform_indices = @transform_2, window_bounds = array<i64: 1, 32>}, {pipeline_mode = #tpu.pipeline_mode<synchronous>, transform_indices = @transform_3, window_bounds = array<i64: 32, 32>}, {pipeline_mode = #tpu.pipeline_mode<synchronous>, transform_indices = @transform_4, window_bounds = array<i64: 1, 32>}, {pipeline_mode = #tpu.pipeline_mode<synchronous>, transform_indices = @transform_5, window_bounds = array<i64: 1, 32>}, {pipeline_mode = #tpu.pipeline_mode<synchronous>, transform_indices = @transform_6, window_bounds = array<i64: 1, 1>}, {transform_indices = @transform_7, window_bounds = array<i64: 1, 256>}]} {
    %c0 = arith.constant 0 : index
    %c0_0 = arith.constant 0 : index
    %0 = vector.load %arg1[%c0, %c0_0] : memref<256x16xf32, #tpu.memory_space<vmem>>, vector<256x16xf32>
    %1 = arith.truncf %0 : vector<256x16xf32> to vector<256x16xbf16>
    %c0_1 = arith.constant 0 : index
    %c0_2 = arith.constant 0 : index
    %2 = vector.load %arg2[%c0_1, %c0_2] : memref<16x32xbf16, #tpu.memory_space<vmem>>, vector<16x32xbf16>
    %cst = arith.constant dense<0.000000e+00> : vector<256x32xf32>
    %3 = tpu.matmul %1, %2, %cst {dimension_numbers = #tpu.dot_dimension_numbers<[1], [0], [0], [1], [0, 0, 1, 1], [], []>} : vector<256x16xbf16>, vector<16x32xbf16>, vector<256x32xf32> -> vector<256x32xf32>
    %c0_3 = arith.constant 0 : index
    %c0_4 = arith.constant 0 : index
    %4 = vector.load %arg3[%c0_3, %c0_4] : memref<1x32xf32, #tpu.memory_space<vmem>>, vector<1x32xf32>
    %5 = vector.broadcast %4 : vector<1x32xf32> to vector<256x32xf32>
    %6 = arith.addf %3, %5 : vector<256x32xf32>
    %cst_5 = arith.constant 0.000000e+00 : f32
    %7 = vector.broadcast %cst_5 : f32 to vector<256x32xf32>
    %8 = arith.maximumf %6, %7 : vector<256x32xf32>
    %9 = arith.truncf %8 : vector<256x32xf32> to vector<256x32xbf16>
    %c0_6 = arith.constant 0 : index
    %c0_7 = arith.constant 0 : index
    %10 = vector.load %arg4[%c0_6, %c0_7] : memref<32x32xbf16, #tpu.memory_space<vmem>>, vector<32x32xbf16>
    %cst_8 = arith.constant dense<0.000000e+00> : vector<256x32xf32>
    %11 = tpu.matmul %9, %10, %cst_8 {dimension_numbers = #tpu.dot_dimension_numbers<[1], [0], [0], [1], [0, 0, 1, 1], [], []>} : vector<256x32xbf16>, vector<32x32xbf16>, vector<256x32xf32> -> vector<256x32xf32>
    %c0_9 = arith.constant 0 : index
    %c0_10 = arith.constant 0 : index
    %12 = vector.load %arg5[%c0_9, %c0_10] : memref<1x32xf32, #tpu.memory_space<vmem>>, vector<1x32xf32>
    %13 = vector.broadcast %12 : vector<1x32xf32> to vector<256x32xf32>
    %14 = arith.addf %11, %13 : vector<256x32xf32>
    %cst_11 = arith.constant 0.000000e+00 : f32
    %15 = vector.broadcast %cst_11 : f32 to vector<256x32xf32>
    %16 = arith.maximumf %14, %15 : vector<256x32xf32>
    %c0_12 = arith.constant 0 : index
    %c0_13 = arith.constant 0 : index
    %17 = vector.load %arg6[%c0_12, %c0_13] : memref<1x32xf32, #tpu.memory_space<vmem>>, vector<1x32xf32>
    %18 = vector.broadcast %17 : vector<1x32xf32> to vector<256x32xf32>
    %19 = arith.mulf %16, %18 : vector<256x32xf32>
    %cst_14 = arith.constant dense<0.000000e+00> : vector<256xf32>
    %20 = vector.multi_reduction <add>, %19, %cst_14 [1] : vector<256x32xf32> to vector<256xf32>
    %21 = vector.shape_cast %20 : vector<256xf32> to vector<256x1xf32>
    %22 = tpu.transpose %21, [1, 0] : vector<256x1xf32> -> vector<1x256xf32>
    %c0_15 = arith.constant 0 : index
    %c0_16 = arith.constant 0 : index
    %23 = vector.load %arg7[%c0_15, %c0_16] : memref<1x1xf32, #tpu.memory_space<vmem>>, vector<1x1xf32>
    %24 = vector.broadcast %23 : vector<1x1xf32> to vector<1x256xf32>
    %25 = arith.addf %22, %24 : vector<1x256xf32>
    %26 = arith.negf %25 : vector<1x256xf32>
    %27 = math.exp %26 : vector<1x256xf32>
    %cst_17 = arith.constant 1.000000e+00 : f32
    %28 = vector.broadcast %cst_17 : f32 to vector<1x256xf32>
    %29 = arith.addf %28, %27 : vector<1x256xf32>
    %30 = arith.divf %28, %29 : vector<1x256xf32>
    %c0_18 = arith.constant 0 : index
    %c0_19 = arith.constant 0 : index
    %31 = vector.load %arg8[%c0_18, %c0_19] : memref<1x256xf32, #tpu.memory_space<vmem>>, vector<1x256xf32>
    tpu.vector_store %arg8[%c0_18, %c0_19], %30 {strides = array<i32>} : memref<1x256xf32, #tpu.memory_space<vmem>>, vector<1x256xf32>,
    return
  }
  func.func @transform_0(%arg0: i32) -> (i32, i32) {
    %c0_i32 = arith.constant 0 : i32
    %c0_i32_0 = arith.constant 0 : i32
    return %arg0, %c0_i32 : i32, i32
  }
  func.func @transform_1(%arg0: i32) -> (i32, i32) {
    %c0_i32 = arith.constant 0 : i32
    %c0_i32_0 = arith.constant 0 : i32
    %c0_i32_1 = arith.constant 0 : i32
    return %c0_i32, %c0_i32_0 : i32, i32
  }
  func.func @transform_2(%arg0: i32) -> (i32, i32) {
    %c0_i32 = arith.constant 0 : i32
    %c0_i32_0 = arith.constant 0 : i32
    %c0_i32_1 = arith.constant 0 : i32
    return %c0_i32, %c0_i32_0 : i32, i32
  }
  func.func @transform_3(%arg0: i32) -> (i32, i32) {
    %c0_i32 = arith.constant 0 : i32
    %c0_i32_0 = arith.constant 0 : i32
    %c0_i32_1 = arith.constant 0 : i32
    return %c0_i32, %c0_i32_0 : i32, i32
  }
  func.func @transform_4(%arg0: i32) -> (i32, i32) {
    %c0_i32 = arith.constant 0 : i32
    %c0_i32_0 = arith.constant 0 : i32
    %c0_i32_1 = arith.constant 0 : i32
    return %c0_i32, %c0_i32_0 : i32, i32
  }
  func.func @transform_5(%arg0: i32) -> (i32, i32) {
    %c0_i32 = arith.constant 0 : i32
    %c0_i32_0 = arith.constant 0 : i32
    %c0_i32_1 = arith.constant 0 : i32
    return %c0_i32, %c0_i32_0 : i32, i32
  }
  func.func @transform_6(%arg0: i32) -> (i32, i32) {
    %c0_i32 = arith.constant 0 : i32
    %c0_i32_0 = arith.constant 0 : i32
    %c0_i32_1 = arith.constant 0 : i32
    return %c0_i32, %c0_i32_0 : i32, i32
  }
  func.func @transform_7(%arg0: i32) -> (i32, i32) {
    %c0_i32 = arith.constant 0 : i32
    %c0_i32_0 = arith.constant 0 : i32
    return %c0_i32, %arg0 : i32, i32
  }
}

</mosaic_0001>

<llo_original>
// kernel: feed_forward_nn.1
$region0: #{feed_forward_nn.1}
  #allocation0 [shape = 'u32[]', space=smem, size = 0x4, offset = 0x4, fixed_abs, tag = 'smem constant byte address 0x4 - core index']
  #allocation1 [shape = 'u32[144,128]{1,0:T(1,128)}', space=vmem, size = 0x12000, scoped, tag = 'internal scratch']
  #allocation2 [shape = 'f32[1,1]{1,0:T(1,128)S(1)}', space=vmem, size = 0x200, scoped, tag = 'scoped memory for feed_forward_nn.1']
  %s0 = inlined_call_operand.vmem [shape: f32[256,16], index: 0, kind: input, shape index: {}]
  %s1 = inlined_call_operand.vmem [shape: bf16[16,32], index: 1, kind: input, shape index: {}]
  %s2 = inlined_call_operand.vmem [shape: f32[1,32], index: 2, kind: input, shape index: {}]
  %s3 = inlined_call_operand.vmem [shape: bf16[32,32], index: 3, kind: input, shape index: {}]
  %s4 = inlined_call_operand.vmem [shape: f32[1,32], index: 4, kind: input, shape index: {}]
  %s5 = inlined_call_operand.vmem [shape: f32[1,32], index: 5, kind: input, shape index: {}]
  %s6 = inlined_call_operand.<no memory space> [shape: f32[1,1], index: 6, kind: input, shape index: {}]
  %s7 = inlined_call_operand.hbm [shape: f32[1,256], index: 7, kind: output, shape index: {}]
  %s8 = sld [smem:[#allocation0]]
  $region38: #{feed_forward_nn.1} parent=0
    _
  %s10 = ssub.s32 1, %s8
  %s11 = scalar_select 0, %s10, %s8
  %v12 = vstv %s6
  %13 = vst [vmem:[#allocation2] sm:$0x1] %v12
  $region1: #{feed_forward_nn.1} parent=0
    #allocation3 [shape = 'u8[1024]{0}', space=vmem, size = 0x400, scoped, tag = 'output window, operand 0, single buffered']
    #allocation4 [shape = 's32[1]{0}', space=sflag, size = 0x4, scoped, tag = 'scoped memory for feed_forward_nn.1']
    %14 = vsyncpa [#allocation4], 0
    // Predicated region
    $region2: #{feed_forward_nn.1} parent=1 // pred_check
      _
    $region3: #{feed_forward_nn.1} parent=1 // pred_check_branch
      %16 = sbr.rel (0) target = $region5
    $region4: #{feed_forward_nn.1} parent=1 // pred_region
      _
    $region5: #{feed_forward_nn.1} parent=1 // pred_fallthru
      _
    // Predicated region
    $region6: #{feed_forward_nn.1} parent=1 // pred_check
      _
    $region7: #{feed_forward_nn.1} parent=1 // pred_check_branch
      %18 = sbr.rel (0) target = $region9
    $region8: #{feed_forward_nn.1} parent=1 // pred_region
      _
    $region9: #{feed_forward_nn.1} parent=1 // pred_fallthru
      _
    // Predicated region
    $region10: #{feed_forward_nn.1} parent=1 // pred_check
      _
    $region11: #{feed_forward_nn.1} parent=1 // pred_check_branch
      %20 = sbr.rel (0) target = $region13
    $region12: #{feed_forward_nn.1} parent=1 // pred_region
      _
    $region13: #{feed_forward_nn.1} parent=1 // pred_fallthru
      _
    // Predicated region
    $region14: #{feed_forward_nn.1} parent=1 // pred_check
      _
    $region15: #{feed_forward_nn.1} parent=1 // pred_check_branch
      %22 = sbr.rel (0) target = $region17
    $region16: #{feed_forward_nn.1} parent=1 // pred_region
      _
    $region17: #{feed_forward_nn.1} parent=1 // pred_fallthru
      _
    // Predicated region
    $region18: #{feed_forward_nn.1} parent=1 // pred_check
      _
    $region19: #{feed_forward_nn.1} parent=1 // pred_check_branch
      %24 = sbr.rel (0) target = $region21
    $region20: #{feed_forward_nn.1} parent=1 // pred_region
      _
    $region21: #{feed_forward_nn.1} parent=1 // pred_fallthru
      _
    // Predicated region
    $region22: #{feed_forward_nn.1} parent=1 // pred_check
      _
    $region23: #{feed_forward_nn.1} parent=1 // pred_check_branch
      %26 = sbr.rel (0) target = $region25
    $region24: #{feed_forward_nn.1} parent=1 // pred_region
      _
    $region25: #{feed_forward_nn.1} parent=1 // pred_fallthru
      _
    // Predicated region
    $region26: #{feed_forward_nn.1} parent=1 // pred_check
      _
    $region27: #{feed_forward_nn.1} parent=1 // pred_check_branch
      %28 = sbr.rel (0) target = $region29
    $region28: #{feed_forward_nn.1} parent=1 // pred_region
      _
    $region29: #{feed_forward_nn.1} parent=1 // pred_fallthru
      _
    %v30 = vld [vmem:[%s0] sm:$0xff]
    %v31 = vld [vmem:[%s0 + $0x8] sm:$0xff]
    %v32 = vld [vmem:[%s0 + $0x10] sm:$0xff]
    %v33 = vld [vmem:[%s0 + $0x18] sm:$0xff]
    %v34 = vld [vmem:[%s0 + $0x20] sm:$0xff]
    %v35 = vld [vmem:[%s0 + $0x28] sm:$0xff]
    %v36 = vld [vmem:[%s0 + $0x30] sm:$0xff]
    %v37 = vld [vmem:[%s0 + $0x38] sm:$0xff]
    %v38 = vld [vmem:[%s0 + $0x40] sm:$0xff]
    %v39 = vld [vmem:[%s0 + $0x48] sm:$0xff]
    %v40 = vld [vmem:[%s0 + $0x50] sm:$0xff]
    %v41 = vld [vmem:[%s0 + $0x58] sm:$0xff]
    %v42 = vld [vmem:[%s0 + $0x60] sm:$0xff]
    %v43 = vld [vmem:[%s0 + $0x68] sm:$0xff]
    %v44 = vld [vmem:[%s0 + $0x70] sm:$0xff]
    %v45 = vld [vmem:[%s0 + $0x78] sm:$0xff]
    %v46 = vld [vmem:[%s0 + $0x80] sm:$0xff]
    %v47 = vld [vmem:[%s0 + $0x88] sm:$0xff]
    %v48 = vld [vmem:[%s0 + $0x90] sm:$0xff]
    %v49 = vld [vmem:[%s0 + $0x98] sm:$0xff]
    %v50 = vld [vmem:[%s0 + $0xa0] sm:$0xff]
    %v51 = vld [vmem:[%s0 + $0xa8] sm:$0xff]
    %v52 = vld [vmem:[%s0 + $0xb0] sm:$0xff]
    %v53 = vld [vmem:[%s0 + $0xb8] sm:$0xff]
    %v54 = vld [vmem:[%s0 + $0xc0] sm:$0xff]
    %v55 = vld [vmem:[%s0 + $0xc8] sm:$0xff]
    %v56 = vld [vmem:[%s0 + $0xd0] sm:$0xff]
    %v57 = vld [vmem:[%s0 + $0xd8] sm:$0xff]
    %v58 = vld [vmem:[%s0 + $0xe0] sm:$0xff]
    %v59 = vld [vmem:[%s0 + $0xe8] sm:$0xff]
    %v60 = vld [vmem:[%s0 + $0xf0] sm:$0xff]
    %v61 = vld [vmem:[%s0 + $0xf8] sm:$0xff]
    %v62 = vpack.c.bf16 %v31, %v30
    %v63 = vpack.c.bf16 %v33, %v32
    %v64 = vpack.c.bf16 %v35, %v34
    %v65 = vpack.c.bf16 %v37, %v36
    %v66 = vpack.c.bf16 %v39, %v38
    %v67 = vpack.c.bf16 %v41, %v40
    %v68 = vpack.c.bf16 %v43, %v42
    %v69 = vpack.c.bf16 %v45, %v44
    %v70 = vpack.c.bf16 %v47, %v46
    %v71 = vpack.c.bf16 %v49, %v48
    %v72 = vpack.c.bf16 %v51, %v50
    %v73 = vpack.c.bf16 %v53, %v52
    %v74 = vpack.c.bf16 %v55, %v54
    %v75 = vpack.c.bf16 %v57, %v56
    %v76 = vpack.c.bf16 %v59, %v58
    %v77 = vpack.c.bf16 %v61, %v60
    %v78 = vld [vmem:[%s1] sm:$0xf]
    %v79 = vld [vmem:[%s1 + $0x4] sm:$0xf]
    %v80 = vld [vmem:[%s2] sm:$0x1]
    %v82 = vlaneseq
    %v83 = vshrl.u32 %v82, 7
    %v84 = vsub.s32 0, %v83
    %v85 = vrot.slane %v80, %v84
    %v89 = vunpack.c.l.b16 %v78
    %v90 = vunpack.c.l.b16 %v79
    %v91 = vpack.c.b16 %v90, %v89
    %vm93 = vcmask 130048
    %v95 = vsel %vm93, %v62, 0
    %v98 = vsel %vm93, %v63, 0
    %v101 = vsel %vm93, %v64, 0
    %v104 = vsel %vm93, %v65, 0
    %v107 = vsel %vm93, %v66, 0
    %v110 = vsel %vm93, %v67, 0
    %v113 = vsel %vm93, %v68, 0
    %v116 = vsel %vm93, %v69, 0
    %v119 = vsel %vm93, %v70, 0
    %v122 = vsel %vm93, %v71, 0
    %v125 = vsel %vm93, %v72, 0
    %v128 = vsel %vm93, %v73, 0
    %v131 = vsel %vm93, %v74, 0
    %v134 = vsel %vm93, %v75, 0
    %v137 = vsel %vm93, %v76, 0
    %v140 = vsel %vm93, %v77, 0
    %142 = vmatprep.subr.bf16.mxu0 0
    %143 = vmatpush1.bf16.msra.mxu0 %v91
    %144 = vmatprep.subr.bf16.mxu0 0
    %145 = vmatpush1.bf16.msra.mxu0 0
    %146 = vmatprep.subr.bf16.mxu0 0
    %147 = vmatpush1.bf16.msra.mxu0 0
    %148 = vmatprep.subr.bf16.mxu0 0
    %149 = vmatpush1.bf16.msra.mxu0 0
    %150 = vmatprep.subr.bf16.mxu0 0
    %151 = vmatpush1.bf16.msra.mxu0 0
    %152 = vmatprep.subr.bf16.mxu0 0
    %153 = vmatpush1.bf16.msra.mxu0 0
    %154 = vmatprep.subr.bf16.mxu0 0
    %155 = vmatpush1.bf16.msra.mxu0 0
    %156 = vmatprep.subr.bf16.mxu0 0
    %157 = vmatpush1.bf16.msra.mxu0 0
    %158 = vmatprep.subr.bf16.mxu0 0
    %159 = vmatpush1.bf16.msra.mxu0 0
    %160 = vmatprep.subr.bf16.mxu0 0
    %161 = vmatpush1.bf16.msra.mxu0 0
    %162 = vmatprep.subr.bf16.mxu0 0
    %163 = vmatpush1.bf16.msra.mxu0 0
    %164 = vmatprep.subr.bf16.mxu0 0
    %165 = vmatpush1.bf16.msra.mxu0 0
    %166 = vmatprep.subr.bf16.mxu0 0
    %167 = vmatpush1.bf16.msra.mxu0 0
    %168 = vmatprep.subr.bf16.mxu0 0
    %169 = vmatpush1.bf16.msra.mxu0 0
    %170 = vmatprep.subr.bf16.mxu0 0
    %171 = vmatpush1.bf16.msra.mxu0 0
    %172 = vmatprep.subr.bf16.mxu0 0
    %173 = vmatpush1.bf16.msra.mxu0 0
    %174 = vmatprep.mubr.bf16.mxu0 0
    %175 = vmatmul.mubr.bf16.gmra.mrb[0].mxu0 %v95
    %v176 = vpop.f32.mrb[0].mxu0
    %v177 = vadd.f32 %v85, %v176
    %v178 = vpop.f32.mrb[0].mxu0
    %v179 = vpop.f32.mrb[0].mxu0
    %v180 = vadd.f32 %v85, %v179
    %v181 = vpop.f32.mrb[0].mxu0
    %182 = vmatprep.mubr.bf16.mxu0 0
    %183 = vmatmul.mubr.bf16.gmra.mrb[0].mxu0 %v98
    %v184 = vpop.f32.mrb[0].mxu0
    %v185 = vadd.f32 %v85, %v184
    %v186 = vpop.f32.mrb[0].mxu0
    %v187 = vpop.f32.mrb[0].mxu0
    %v188 = vadd.f32 %v85, %v187
    %v189 = vpop.f32.mrb[0].mxu0
    %190 = vmatprep.mubr.bf16.mxu0 0
    %191 = vmatmul.mubr.bf16.gmra.mrb[0].mxu0 %v101
    %v192 = vpop.f32.mrb[0].mxu0
    %v193 = vadd.f32 %v85, %v192
    %v194 = vpop.f32.mrb[0].mxu0
    %v195 = vpop.f32.mrb[0].mxu0
    %v196 = vadd.f32 %v85, %v195
    %v197 = vpop.f32.mrb[0].mxu0
    %198 = vmatprep.mubr.bf16.mxu0 0
    %199 = vmatmul.mubr.bf16.gmra.mrb[0].mxu0 %v104
    %v200 = vpop.f32.mrb[0].mxu0
    %v201 = vadd.f32 %v85, %v200
    %v202 = vpop.f32.mrb[0].mxu0
    %v203 = vpop.f32.mrb[0].mxu0
    %v204 = vadd.f32 %v85, %v203
    %v205 = vpop.f32.mrb[0].mxu0
    %206 = vmatprep.mubr.bf16.mxu0 0
    %207 = vmatmul.mubr.bf16.gmra.mrb[0].mxu0 %v107
    %v208 = vpop.f32.mrb[0].mxu0
    %v209 = vadd.f32 %v85, %v208
    %v210 = vpop.f32.mrb[0].mxu0
    %v211 = vpop.f32.mrb[0].mxu0
    %v212 = vadd.f32 %v85, %v211
    %v213 = vpop.f32.mrb[0].mxu0
    %214 = vmatprep.mubr.bf16.mxu0 0
    %215 = vmatmul.mubr.bf16.gmra.mrb[0].mxu0 %v110
    %v216 = vpop.f32.mrb[0].mxu0
    %v217 = vadd.f32 %v85, %v216
    %v218 = vpop.f32.mrb[0].mxu0
    %v219 = vpop.f32.mrb[0].mxu0
    %v220 = vadd.f32 %v85, %v219
    %v221 = vpop.f32.mrb[0].mxu0
    %222 = vmatprep.mubr.bf16.mxu0 0
    %223 = vmatmul.mubr.bf16.gmra.mrb[0].mxu0 %v113
    %v224 = vpop.f32.mrb[0].mxu0
    %v225 = vadd.f32 %v85, %v224
    %v226 = vpop.f32.mrb[0].mxu0
    %v227 = vpop.f32.mrb[0].mxu0
    %v228 = vadd.f32 %v85, %v227
    %v229 = vpop.f32.mrb[0].mxu0
    %230 = vmatprep.mubr.bf16.mxu0 0
    %231 = vmatmul.mubr.bf16.gmra.mrb[0].mxu0 %v116
    %v232 = vpop.f32.mrb[0].mxu0
    %v233 = vadd.f32 %v85, %v232
    %v234 = vpop.f32.mrb[0].mxu0
    %v235 = vpop.f32.mrb[0].mxu0
    %v236 = vadd.f32 %v85, %v235
    %v237 = vpop.f32.mrb[0].mxu0
    %238 = vmatprep.mubr.bf16.mxu0 0
    %239 = vmatmul.mubr.bf16.gmra.mrb[0].mxu0 %v119
    %v240 = vpop.f32.mrb[0].mxu0
    %v241 = vadd.f32 %v85, %v240
    %v242 = vpop.f32.mrb[0].mxu0
    %v243 = vpop.f32.mrb[0].mxu0
    %v244 = vadd.f32 %v85, %v243
    %v245 = vpop.f32.mrb[0].mxu0
    %246 = vmatprep.mubr.bf16.mxu0 0
    %247 = vmatmul.mubr.bf16.gmra.mrb[0].mxu0 %v122
    %v248 = vpop.f32.mrb[0].mxu0
    %v249 = vadd.f32 %v85, %v248
    %v250 = vpop.f32.mrb[0].mxu0
    %v251 = vpop.f32.mrb[0].mxu0
    %v252 = vadd.f32 %v85, %v251
    %v253 = vpop.f32.mrb[0].mxu0
    %254 = vmatprep.mubr.bf16.mxu0 0
    %255 = vmatmul.mubr.bf16.gmra.mrb[0].mxu0 %v125
    %v256 = vpop.f32.mrb[0].mxu0
    %v257 = vadd.f32 %v85, %v256
    %v258 = vpop.f32.mrb[0].mxu0
    %v259 = vpop.f32.mrb[0].mxu0
    %v260 = vadd.f32 %v85, %v259
    %v261 = vpop.f32.mrb[0].mxu0
    %262 = vmatprep.mubr.bf16.mxu0 0
    %263 = vmatmul.mubr.bf16.gmra.mrb[0].mxu0 %v128
    %v264 = vpop.f32.mrb[0].mxu0
    %v265 = vadd.f32 %v85, %v264
    %v266 = vpop.f32.mrb[0].mxu0
    %v267 = vpop.f32.mrb[0].mxu0
    %v268 = vadd.f32 %v85, %v267
    %v269 = vpop.f32.mrb[0].mxu0
    %270 = vmatprep.mubr.bf16.mxu0 0
    %271 = vmatmul.mubr.bf16.gmra.mrb[0].mxu0 %v131
    %v272 = vpop.f32.mrb[0].mxu0
    %v273 = vadd.f32 %v85, %v272
    %v274 = vpop.f32.mrb[0].mxu0
    %v275 = vpop.f32.mrb[0].mxu0
    %v276 = vadd.f32 %v85, %v275
    %v277 = vpop.f32.mrb[0].mxu0
    %278 = vmatprep.mubr.bf16.mxu0 0
    %279 = vmatmul.mubr.bf16.gmra.mrb[0].mxu0 %v134
    %v280 = vpop.f32.mrb[0].mxu0
    %v281 = vadd.f32 %v85, %v280
    %v282 = vpop.f32.mrb[0].mxu0
    %v283 = vpop.f32.mrb[0].mxu0
    %v284 = vadd.f32 %v85, %v283
    %v285 = vpop.f32.mrb[0].mxu0
    %286 = vmatprep.mubr.bf16.mxu0 0
    %287 = vmatmul.mubr.bf16.gmra.mrb[0].mxu0 %v137
    %v288 = vpop.f32.mrb[0].mxu0
    %v289 = vadd.f32 %v85, %v288
    %v290 = vpop.f32.mrb[0].mxu0
    %v291 = vpop.f32.mrb[0].mxu0
    %v292 = vadd.f32 %v85, %v291
    %v293 = vpop.f32.mrb[0].mxu0
    %294 = vmatprep.mubr.bf16.mxu0 0
    %295 = vmatmul.mubr.bf16.gmra.mrb[0].mxu0 %v140
    %v296 = vpop.f32.mrb[0].mxu0
    %v297 = vadd.f32 %v85, %v296
    %v298 = vpop.f32.mrb[0].mxu0
    %v299 = vpop.f32.mrb[0].mxu0
    %v300 = vadd.f32 %v85, %v299
    %v301 = vpop.f32.mrb[0].mxu0
    %302 = vdwg.mxu0
    %v303 = vmax.f32 %v177, 0.0
    %v304 = vmax.f32 %v180, 0.0
    %v305 = vmax.f32 %v185, 0.0
    %v306 = vmax.f32 %v188, 0.0
    %v307 = vmax.f32 %v193, 0.0
    %v308 = vmax.f32 %v196, 0.0
    %v309 = vmax.f32 %v201, 0.0
    %v310 = vmax.f32 %v204, 0.0
    %v311 = vmax.f32 %v209, 0.0
    %v312 = vmax.f32 %v212, 0.0
    %v313 = vmax.f32 %v217, 0.0
    %v314 = vmax.f32 %v220, 0.0
    %v315 = vmax.f32 %v225, 0.0
    %v316 = vmax.f32 %v228, 0.0
    %v317 = vmax.f32 %v233, 0.0
    %v318 = vmax.f32 %v236, 0.0
    %v319 = vmax.f32 %v241, 0.0
    %v320 = vmax.f32 %v244, 0.0
    %v321 = vmax.f32 %v249, 0.0
    %v322 = vmax.f32 %v252, 0.0
    %v323 = vmax.f32 %v257, 0.0
    %v324 = vmax.f32 %v260, 0.0
    %v325 = vmax.f32 %v265, 0.0
    %v326 = vmax.f32 %v268, 0.0
    %v327 = vmax.f32 %v273, 0.0
    %v328 = vmax.f32 %v276, 0.0
    %v329 = vmax.f32 %v281, 0.0
    %v330 = vmax.f32 %v284, 0.0
    %v331 = vmax.f32 %v289, 0.0
    %v332 = vmax.f32 %v292, 0.0
    %v333 = vmax.f32 %v297, 0.0
    %v334 = vmax.f32 %v300, 0.0
    %v335 = vpack.c.bf16 %v304, %v303
    %v336 = vpack.c.bf16 %v306, %v305
    %v337 = vpack.c.bf16 %v308, %v307
    %v338 = vpack.c.bf16 %v310, %v309
    %v339 = vpack.c.bf16 %v312, %v311
    %v340 = vpack.c.bf16 %v314, %v313
    %v341 = vpack.c.bf16 %v316, %v315
    %v342 = vpack.c.bf16 %v318, %v317
    %v343 = vpack.c.bf16 %v320, %v319
    %v344 = vpack.c.bf16 %v322, %v321
    %v345 = vpack.c.bf16 %v324, %v323
    %v346 = vpack.c.bf16 %v326, %v325
    %v347 = vpack.c.bf16 %v328, %v327
    %v348 = vpack.c.bf16 %v330, %v329
    %v349 = vpack.c.bf16 %v332, %v331
    %v350 = vpack.c.bf16 %v334, %v333
    %v351 = vld [vmem:[%s3] sm:$0xf]
    %v352 = vld [vmem:[%s3 + $0x4] sm:$0xf]
    %v353 = vld [vmem:[%s3 + $0x8] sm:$0xf]
    %v354 = vld [vmem:[%s3 + $0xc] sm:$0xf]
    %v355 = vld [vmem:[%s4] sm:$0x1]
    %v357 = vlaneseq
    %v358 = vshrl.u32 %v357, 7
    %v359 = vsub.s32 0, %v358
    %v360 = vrot.slane %v355, %v359
    %v366 = vunpack.c.l.b16 %v351
    %v367 = vunpack.c.l.b16 %v352
    %v368 = vunpack.c.l.b16 %v353
    %v369 = vunpack.c.l.b16 %v354
    %v370 = vpack.c.b16 %v367, %v366
    %v371 = vpack.c.b16 %v369, %v368
    %vm374 = vcmask 261120
    %v376 = vsel %vm374, %v335, 0
    %v379 = vsel %vm374, %v336, 0
    %v382 = vsel %vm374, %v337, 0
    %v385 = vsel %vm374, %v338, 0
    %v388 = vsel %vm374, %v339, 0
    %v391 = vsel %vm374, %v340, 0
    %v394 = vsel %vm374, %v341, 0
    %v397 = vsel %vm374, %v342, 0
    %v400 = vsel %vm374, %v343, 0
    %v403 = vsel %vm374, %v344, 0
    %v406 = vsel %vm374, %v345, 0
    %v409 = vsel %vm374, %v346, 0
    %v412 = vsel %vm374, %v347, 0
    %v415 = vsel %vm374, %v348, 0
    %v418 = vsel %vm374, %v349, 0
    %v421 = vsel %vm374, %v350, 0
    %423 = vmatprep.subr.bf16.mxu0 0
    %424 = vmatpush1.bf16.msra.mxu0 %v370
    %425 = vmatprep.subr.bf16.mxu0 0
    %426 = vmatpush1.bf16.msra.mxu0 %v371
    %427 = vmatprep.subr.bf16.mxu0 0
    %428 = vmatpush1.bf16.msra.mxu0 0
    %429 = vmatprep.subr.bf16.mxu0 0
    %430 = vmatpush1.bf16.msra.mxu0 0
    %431 = vmatprep.subr.bf16.mxu0 0
    %432 = vmatpush1.bf16.msra.mxu0 0
    %433 = vmatprep.subr.bf16.mxu0 0
    %434 = vmatpush1.bf16.msra.mxu0 0
    %435 = vmatprep.subr.bf16.mxu0 0
    %436 = vmatpush1.bf16.msra.mxu0 0
    %437 = vmatprep.subr.bf16.mxu0 0
    %438 = vmatpush1.bf16.msra.mxu0 0
    %439 = vmatprep.subr.bf16.mxu0 0
    %440 = vmatpush1.bf16.msra.mxu0 0
    %441 = vmatprep.subr.bf16.mxu0 0
    %442 = vmatpush1.bf16.msra.mxu0 0
    %443 = vmatprep.subr.bf16.mxu0 0
    %444 = vmatpush1.bf16.msra.mxu0 0
    %445 = vmatprep.subr.bf16.mxu0 0
    %446 = vmatpush1.bf16.msra.mxu0 0
    %447 = vmatprep.subr.bf16.mxu0 0
    %448 = vmatpush1.bf16.msra.mxu0 0
    %449 = vmatprep.subr.bf16.mxu0 0
    %450 = vmatpush1.bf16.msra.mxu0 0
    %451 = vmatprep.subr.bf16.mxu0 0
    %452 = vmatpush1.bf16.msra.mxu0 0
    %453 = vmatprep.subr.bf16.mxu0 0
    %454 = vmatpush1.bf16.msra.mxu0 0
    %455 = vmatprep.mubr.bf16.mxu0 0
    %456 = vmatmul.mubr.bf16.gmra.mrb[0].mxu0 %v376
    %v457 = vpop.f32.mrb[0].mxu0
    %v458 = vadd.f32 %v360, %v457
    %v459 = vpop.f32.mrb[0].mxu0
    %v460 = vpop.f32.mrb[0].mxu0
    %v461 = vadd.f32 %v360, %v460
    %v462 = vpop.f32.mrb[0].mxu0
    %463 = vmatprep.mubr.bf16.mxu0 0
    %464 = vmatmul.mubr.bf16.gmra.mrb[0].mxu0 %v379
    %v465 = vpop.f32.mrb[0].mxu0
    %v466 = vadd.f32 %v360, %v465
    %v467 = vpop.f32.mrb[0].mxu0
    %v468 = vpop.f32.mrb[0].mxu0
    %v469 = vadd.f32 %v360, %v468
    %v470 = vpop.f32.mrb[0].mxu0
    %471 = vmatprep.mubr.bf16.mxu0 0
    %472 = vmatmul.mubr.bf16.gmra.mrb[0].mxu0 %v382
    %v473 = vpop.f32.mrb[0].mxu0
    %v474 = vadd.f32 %v360, %v473
    %v475 = vpop.f32.mrb[0].mxu0
    %v476 = vpop.f32.mrb[0].mxu0
    %v477 = vadd.f32 %v360, %v476
    %v478 = vpop.f32.mrb[0].mxu0
    %479 = vmatprep.mubr.bf16.mxu0 0
    %480 = vmatmul.mubr.bf16.gmra.mrb[0].mxu0 %v385
    %v481 = vpop.f32.mrb[0].mxu0
    %v482 = vadd.f32 %v360, %v481
    %v483 = vpop.f32.mrb[0].mxu0
    %v484 = vpop.f32.mrb[0].mxu0
    %v485 = vadd.f32 %v360, %v484
    %v486 = vpop.f32.mrb[0].mxu0
    %487 = vmatprep.mubr.bf16.mxu0 0
    %488 = vmatmul.mubr.bf16.gmra.mrb[0].mxu0 %v388
    %v489 = vpop.f32.mrb[0].mxu0
    %v490 = vadd.f32 %v360, %v489
    %v491 = vpop.f32.mrb[0].mxu0
    %v492 = vpop.f32.mrb[0].mxu0
    %v493 = vadd.f32 %v360, %v492
    %v494 = vpop.f32.mrb[0].mxu0
    %495 = vmatprep.mubr.bf16.mxu0 0
    %496 = vmatmul.mubr.bf16.gmra.mrb[0].mxu0 %v391
    %v497 = vpop.f32.mrb[0].mxu0
    %v498 = vadd.f32 %v360, %v497
    %v499 = vpop.f32.mrb[0].mxu0
    %v500 = vpop.f32.mrb[0].mxu0
    %v501 = vadd.f32 %v360, %v500
    %v502 = vpop.f32.mrb[0].mxu0
    %503 = vmatprep.mubr.bf16.mxu0 0
    %504 = vmatmul.mubr.bf16.gmra.mrb[0].mxu0 %v394
    %v505 = vpop.f32.mrb[0].mxu0
    %v506 = vadd.f32 %v360, %v505
    %v507 = vpop.f32.mrb[0].mxu0
    %v508 = vpop.f32.mrb[0].mxu0
    %v509 = vadd.f32 %v360, %v508
    %v510 = vpop.f32.mrb[0].mxu0
    %511 = vmatprep.mubr.bf16.mxu0 0
    %512 = vmatmul.mubr.bf16.gmra.mrb[0].mxu0 %v397
    %v513 = vpop.f32.mrb[0].mxu0
    %v514 = vadd.f32 %v360, %v513
    %v515 = vpop.f32.mrb[0].mxu0
    %v516 = vpop.f32.mrb[0].mxu0
    %v517 = vadd.f32 %v360, %v516
    %v518 = vpop.f32.mrb[0].mxu0
    %519 = vmatprep.mubr.bf16.mxu0 0
    %520 = vmatmul.mubr.bf16.gmra.mrb[0].mxu0 %v400
    %v521 = vpop.f32.mrb[0].mxu0
    %v522 = vadd.f32 %v360, %v521
    %v523 = vpop.f32.mrb[0].mxu0
    %v524 = vpop.f32.mrb[0].mxu0
    %v525 = vadd.f32 %v360, %v524
    %v526 = vpop.f32.mrb[0].mxu0
    %527 = vmatprep.mubr.bf16.mxu0 0
    %528 = vmatmul.mubr.bf16.gmra.mrb[0].mxu0 %v403
    %v529 = vpop.f32.mrb[0].mxu0
    %v530 = vadd.f32 %v360, %v529
    %v531 = vpop.f32.mrb[0].mxu0
    %v532 = vpop.f32.mrb[0].mxu0
    %v533 = vadd.f32 %v360, %v532
    %v534 = vpop.f32.mrb[0].mxu0
    %535 = vmatprep.mubr.bf16.mxu0 0
    %536 = vmatmul.mubr.bf16.gmra.mrb[0].mxu0 %v406
    %v537 = vpop.f32.mrb[0].mxu0
    %v538 = vadd.f32 %v360, %v537
    %v539 = vpop.f32.mrb[0].mxu0
    %v540 = vpop.f32.mrb[0].mxu0
    %v541 = vadd.f32 %v360, %v540
    %v542 = vpop.f32.mrb[0].mxu0
    %543 = vmatprep.mubr.bf16.mxu0 0
    %544 = vmatmul.mubr.bf16.gmra.mrb[0].mxu0 %v409
    %v545 = vpop.f32.mrb[0].mxu0
    %v546 = vadd.f32 %v360, %v545
    %v547 = vpop.f32.mrb[0].mxu0
    %v548 = vpop.f32.mrb[0].mxu0
    %v549 = vadd.f32 %v360, %v548
    %v550 = vpop.f32.mrb[0].mxu0
    %551 = vmatprep.mubr.bf16.mxu0 0
    %552 = vmatmul.mubr.bf16.gmra.mrb[0].mxu0 %v412
    %v553 = vpop.f32.mrb[0].mxu0
    %v554 = vadd.f32 %v360, %v553
    %v555 = vpop.f32.mrb[0].mxu0
    %v556 = vpop.f32.mrb[0].mxu0
    %v557 = vadd.f32 %v360, %v556
    %v558 = vpop.f32.mrb[0].mxu0
    %559 = vmatprep.mubr.bf16.mxu0 0
    %560 = vmatmul.mubr.bf16.gmra.mrb[0].mxu0 %v415
    %v561 = vpop.f32.mrb[0].mxu0
    %v562 = vadd.f32 %v360, %v561
    %v563 = vpop.f32.mrb[0].mxu0
    %v564 = vpop.f32.mrb[0].mxu0
    %v565 = vadd.f32 %v360, %v564
    %v566 = vpop.f32.mrb[0].mxu0
    %567 = vmatprep.mubr.bf16.mxu0 0
    %568 = vmatmul.mubr.bf16.gmra.mrb[0].mxu0 %v418
    %v569 = vpop.f32.mrb[0].mxu0
    %v570 = vadd.f32 %v360, %v569
    %v571 = vpop.f32.mrb[0].mxu0
    %v572 = vpop.f32.mrb[0].mxu0
    %v573 = vadd.f32 %v360, %v572
    %v574 = vpop.f32.mrb[0].mxu0
    %575 = vmatprep.mubr.bf16.mxu0 0
    %576 = vmatmul.mubr.bf16.gmra.mrb[0].mxu0 %v421
    %v577 = vpop.f32.mrb[0].mxu0
    %v578 = vadd.f32 %v360, %v577
    %v579 = vpop.f32.mrb[0].mxu0
    %v580 = vpop.f32.mrb[0].mxu0
    %v581 = vadd.f32 %v360, %v580
    %v582 = vpop.f32.mrb[0].mxu0
    %583 = vdwg.mxu0
    %v584 = vmax.f32 %v458, 0.0
    %v585 = vmax.f32 %v461, 0.0
    %v586 = vmax.f32 %v466, 0.0
    %v587 = vmax.f32 %v469, 0.0
    %v588 = vmax.f32 %v474, 0.0
    %v589 = vmax.f32 %v477, 0.0
    %v590 = vmax.f32 %v482, 0.0
    %v591 = vmax.f32 %v485, 0.0
    %v592 = vmax.f32 %v490, 0.0
    %v593 = vmax.f32 %v493, 0.0
    %v594 = vmax.f32 %v498, 0.0
    %v595 = vmax.f32 %v501, 0.0
    %v596 = vmax.f32 %v506, 0.0
    %v597 = vmax.f32 %v509, 0.0
    %v598 = vmax.f32 %v514, 0.0
    %v599 = vmax.f32 %v517, 0.0
    %v600 = vmax.f32 %v522, 0.0
    %v601 = vmax.f32 %v525, 0.0
    %v602 = vmax.f32 %v530, 0.0
    %v603 = vmax.f32 %v533, 0.0
    %v604 = vmax.f32 %v538, 0.0
    %v605 = vmax.f32 %v541, 0.0
    %v606 = vmax.f32 %v546, 0.0
    %v607 = vmax.f32 %v549, 0.0
    %v608 = vmax.f32 %v554, 0.0
    %v609 = vmax.f32 %v557, 0.0
    %v610 = vmax.f32 %v562, 0.0
    %v611 = vmax.f32 %v565, 0.0
    %v612 = vmax.f32 %v570, 0.0
    %v613 = vmax.f32 %v573, 0.0
    %v614 = vmax.f32 %v578, 0.0
    %v615 = vmax.f32 %v581, 0.0
    %v616 = vld [vmem:[%s5] sm:$0x1]
    %v618 = vlaneseq
    %v619 = vshrl.u32 %v618, 7
    %v620 = vsub.s32 0, %v619
    %v621 = vrot.slane %v616, %v620
    %v623 = vmul.f32 %v584, %v621
    %v624 = vmul.f32 %v585, %v621
    %v625 = vmul.f32 %v586, %v621
    %v626 = vmul.f32 %v587, %v621
    %v627 = vmul.f32 %v588, %v621
    %v628 = vmul.f32 %v589, %v621
    %v629 = vmul.f32 %v590, %v621
    %v630 = vmul.f32 %v591, %v621
    %v631 = vmul.f32 %v592, %v621
    %v632 = vmul.f32 %v593, %v621
    %v633 = vmul.f32 %v594, %v621
    %v634 = vmul.f32 %v595, %v621
    %v635 = vmul.f32 %v596, %v621
    %v636 = vmul.f32 %v597, %v621
    %v637 = vmul.f32 %v598, %v621
    %v638 = vmul.f32 %v599, %v621
    %v639 = vmul.f32 %v600, %v621
    %v640 = vmul.f32 %v601, %v621
    %v641 = vmul.f32 %v602, %v621
    %v642 = vmul.f32 %v603, %v621
    %v643 = vmul.f32 %v604, %v621
    %v644 = vmul.f32 %v605, %v621
    %v645 = vmul.f32 %v606, %v621
    %v646 = vmul.f32 %v607, %v621
    %v647 = vmul.f32 %v608, %v621
    %v648 = vmul.f32 %v609, %v621
    %v649 = vmul.f32 %v610, %v621
    %v650 = vmul.f32 %v611, %v621
    %v651 = vmul.f32 %v612, %v621
    %v652 = vmul.f32 %v613, %v621
    %v653 = vmul.f32 %v614, %v621
    %v654 = vmul.f32 %v615, %v621
    %v655 = vsel %vm374, %v623, 0.0
    %656 = vadd.xlane.f32.xlu0 %v655
    %v657 = vpop.xlane.xlu0 %656
    %v658 = vsel %vm374, %v624, 0.0
    %659 = vadd.xlane.f32.xlu0 %v658
    %v660 = vpop.xlane.xlu0 %659
    %v661 = vsel %vm374, %v625, 0.0
    %662 = vadd.xlane.f32.xlu0 %v661
    %v663 = vpop.xlane.xlu0 %662
    %v664 = vsel %vm374, %v626, 0.0
    %665 = vadd.xlane.f32.xlu0 %v664
    %v666 = vpop.xlane.xlu0 %665
    %v667 = vsel %vm374, %v627, 0.0
    %668 = vadd.xlane.f32.xlu0 %v667
    %v669 = vpop.xlane.xlu0 %668
    %v670 = vsel %vm374, %v628, 0.0
    %671 = vadd.xlane.f32.xlu0 %v670
    %v672 = vpop.xlane.xlu0 %671
    %v673 = vsel %vm374, %v629, 0.0
    %674 = vadd.xlane.f32.xlu0 %v673
    %v675 = vpop.xlane.xlu0 %674
    %v676 = vsel %vm374, %v630, 0.0
    %677 = vadd.xlane.f32.xlu0 %v676
    %v678 = vpop.xlane.xlu0 %677
    %v679 = vsel %vm374, %v631, 0.0
    %680 = vadd.xlane.f32.xlu0 %v679
    %v681 = vpop.xlane.xlu0 %680
    %v682 = vsel %vm374, %v632, 0.0
    %683 = vadd.xlane.f32.xlu0 %v682
    %v684 = vpop.xlane.xlu0 %683
    %v685 = vsel %vm374, %v633, 0.0
    %686 = vadd.xlane.f32.xlu0 %v685
    %v687 = vpop.xlane.xlu0 %686
    %v688 = vsel %vm374, %v634, 0.0
    %689 = vadd.xlane.f32.xlu0 %v688
    %v690 = vpop.xlane.xlu0 %689
    %v691 = vsel %vm374, %v635, 0.0
    %692 = vadd.xlane.f32.xlu0 %v691
    %v693 = vpop.xlane.xlu0 %692
    %v694 = vsel %vm374, %v636, 0.0
    %695 = vadd.xlane.f32.xlu0 %v694
    %v696 = vpop.xlane.xlu0 %695
    %v697 = vsel %vm374, %v637, 0.0
    %698 = vadd.xlane.f32.xlu0 %v697
    %v699 = vpop.xlane.xlu0 %698
    %v700 = vsel %vm374, %v638, 0.0
    %701 = vadd.xlane.f32.xlu0 %v700
    %v702 = vpop.xlane.xlu0 %701
    %v703 = vsel %vm374, %v639, 0.0
    %704 = vadd.xlane.f32.xlu0 %v703
    %v705 = vpop.xlane.xlu0 %704
    %v706 = vsel %vm374, %v640, 0.0
    %707 = vadd.xlane.f32.xlu0 %v706
    %v708 = vpop.xlane.xlu0 %707
    %v709 = vsel %vm374, %v641, 0.0
    %710 = vadd.xlane.f32.xlu0 %v709
    %v711 = vpop.xlane.xlu0 %710
    %v712 = vsel %vm374, %v642, 0.0
    %713 = vadd.xlane.f32.xlu0 %v712
    %v714 = vpop.xlane.xlu0 %713
    %v715 = vsel %vm374, %v643, 0.0
    %716 = vadd.xlane.f32.xlu0 %v715
    %v717 = vpop.xlane.xlu0 %716
    %v718 = vsel %vm374, %v644, 0.0
    %719 = vadd.xlane.f32.xlu0 %v718
    %v720 = vpop.xlane.xlu0 %719
    %v721 = vsel %vm374, %v645, 0.0
    %722 = vadd.xlane.f32.xlu0 %v721
    %v723 = vpop.xlane.xlu0 %722
    %v724 = vsel %vm374, %v646, 0.0
    %725 = vadd.xlane.f32.xlu0 %v724
    %v726 = vpop.xlane.xlu0 %725
    %v727 = vsel %vm374, %v647, 0.0
    %728 = vadd.xlane.f32.xlu0 %v727
    %v729 = vpop.xlane.xlu0 %728
    %v730 = vsel %vm374, %v648, 0.0
    %731 = vadd.xlane.f32.xlu0 %v730
    %v732 = vpop.xlane.xlu0 %731
    %v733 = vsel %vm374, %v649, 0.0
    %734 = vadd.xlane.f32.xlu0 %v733
    %v735 = vpop.xlane.xlu0 %734
    %v736 = vsel %vm374, %v650, 0.0
    %737 = vadd.xlane.f32.xlu0 %v736
    %v738 = vpop.xlane.xlu0 %737
    %v739 = vsel %vm374, %v651, 0.0
    %740 = vadd.xlane.f32.xlu0 %v739
    %v741 = vpop.xlane.xlu0 %740
    %v742 = vsel %vm374, %v652, 0.0
    %743 = vadd.xlane.f32.xlu0 %v742
    %v744 = vpop.xlane.xlu0 %743
    %v745 = vsel %vm374, %v653, 0.0
    %746 = vadd.xlane.f32.xlu0 %v745
    %v747 = vpop.xlane.xlu0 %746
    %v748 = vsel %vm374, %v654, 0.0
    %749 = vadd.xlane.f32.xlu0 %v748
    %v750 = vpop.xlane.xlu0 %749
    %751 = vxpose.xlu0.b32.start [1/16] %v657, 128
    %752 = vxpose.xlu0.b32.cont [2/16] %v660, 128
    %753 = vxpose.xlu0.b32.cont [3/16] %v663, 128
    %754 = vxpose.xlu0.b32.cont [4/16] %v666, 128
    %755 = vxpose.xlu0.b32.cont [5/16] %v669, 128
    %756 = vxpose.xlu0.b32.cont [6/16] %v672, 128
    %757 = vxpose.xlu0.b32.cont [7/16] %v675, 128
    %758 = vxpose.xlu0.b32.cont [8/16] %v678, 128
    %759 = vxpose.xlu0.b32.cont [9/16] %v681, 128
    %760 = vxpose.xlu0.b32.cont [10/16] %v684, 128
    %761 = vxpose.xlu0.b32.cont [11/16] %v687, 128
    %762 = vxpose.xlu0.b32.cont [12/16] %v690, 128
    %763 = vxpose.xlu0.b32.cont [13/16] %v693, 128
    %764 = vxpose.xlu0.b32.cont [14/16] %v696, 128
    %765 = vxpose.xlu0.b32.cont [15/16] %v699, 128
    %766 = vxpose.xlu0.b32.end [16/16] %v702, 128
    %v767 = vpop.trf.xlu0
    %v768 = vpop.trf.xlu0
    %v769 = vpop.trf.xlu0
    %v770 = vpop.trf.xlu0
    %v771 = vpop.trf.xlu0
    %v772 = vpop.trf.xlu0
    %v773 = vpop.trf.xlu0
    %v774 = vpop.trf.xlu0
    %v775 = vpop.trf.xlu0
    %v776 = vpop.trf.xlu0
    %v777 = vpop.trf.xlu0
    %v778 = vpop.trf.xlu0
    %v779 = vpop.trf.xlu0
    %v780 = vpop.trf.xlu0
    %v781 = vpop.trf.xlu0
    %v782 = vpop.trf.xlu0
    %783 = vxpose.xlu0.b32.start [1/16] %v705, 128
    %784 = vxpose.xlu0.b32.cont [2/16] %v708, 128
    %785 = vxpose.xlu0.b32.cont [3/16] %v711, 128
    %786 = vxpose.xlu0.b32.cont [4/16] %v714, 128
    %787 = vxpose.xlu0.b32.cont [5/16] %v717, 128
    %788 = vxpose.xlu0.b32.cont [6/16] %v720, 128
    %789 = vxpose.xlu0.b32.cont [7/16] %v723, 128
    %790 = vxpose.xlu0.b32.cont [8/16] %v726, 128
    %791 = vxpose.xlu0.b32.cont [9/16] %v729, 128
    %792 = vxpose.xlu0.b32.cont [10/16] %v732, 128
    %793 = vxpose.xlu0.b32.cont [11/16] %v735, 128
    %794 = vxpose.xlu0.b32.cont [12/16] %v738, 128
    %795 = vxpose.xlu0.b32.cont [13/16] %v741, 128
    %796 = vxpose.xlu0.b32.cont [14/16] %v744, 128
    %797 = vxpose.xlu0.b32.cont [15/16] %v747, 128
    %798 = vxpose.xlu0.b32.end [16/16] %v750, 128
    %v799 = vpop.trf.xlu0
    %v800 = vpop.trf.xlu0
    %v801 = vpop.trf.xlu0
    %v802 = vpop.trf.xlu0
    %v803 = vpop.trf.xlu0
    %v804 = vpop.trf.xlu0
    %v805 = vpop.trf.xlu0
    %v806 = vpop.trf.xlu0
    %v807 = vpop.trf.xlu0
    %v808 = vpop.trf.xlu0
    %v809 = vpop.trf.xlu0
    %v810 = vpop.trf.xlu0
    %v811 = vpop.trf.xlu0
    %v812 = vpop.trf.xlu0
    %v813 = vpop.trf.xlu0
    %v814 = vpop.trf.xlu0
    %v815 = vld [vmem:[#allocation2] sm:$0x1]
    %817 = vset.pattern.permute.xlu0 0
    %818 = vperm.xlu0 %817, %v815
    %v819 = vpop.permute.xlu0 %818
    %v821 = vlaneseq
    %v822 = vshrl.u32 %v821, 7
    %v823 = vsub.s32 0, %v822
    %v824 = vrot.slane %v819, %v823
    %v825 = vadd.f32 %v767, %v824
    %v826 = vadd.f32 %v799, %v824
    %v827 = vxor.u32 %v825, 2147483648
    %v828 = vxor.u32 %v826, 2147483648
    %v829 = vmul.f32 %v827, 1.442695
    %v830 = vpow.pop %v829
    %v831 = vmul.f32 %v828, 1.442695
    %v832 = vpow.pop %v831
    %v833 = vadd.f32 %v830, 1.0
    %v834 = vadd.f32 %v832, 1.0
    %v835 = vrcp.pop %v833
    %v836 = vmul.f32 1.0, %v835
    %v837 = vrcp.pop %v834
    %v838 = vmul.f32 1.0, %v837
    %v841 = vcombine.low %v836, %v838
    %v843 = vunpack.c.l.s4 1966171168
    %v844 = vunpack.c.0.s8 %v843
    %v845 = vlaneseq
    %v846 = vshrl.u32 %v845, 7
    %v847 = vsub.s32 %v844, %v846
    %v848 = vrot.slane %v841, %v847
    %v850 = vunpack.c.l.s4 1966171168
    %v851 = vunpack.c.0.s8 %v850
    %v852 = vlaneseq
    %v853 = vshrl.u32 %v852, 7
    %v854 = vsub.s32 %v851, %v853
    %v855 = vrot.slane %v848, %v854
    %v857 = vlaneseq
    %vm858 = vcmp.ge.s32.totalorder %v857, 0
    %vm859 = vcmp.lt.s32.totalorder %v857, 256
    %vm860 = vmand %vm858, %vm859
    %861 = vst.msk [vmem:[#allocation3] sm:$0x3] %vm860, %v855
    // Predicated region
    $region30: #{feed_forward_nn.1} parent=1 // pred_check
      _
    $region31: #{feed_forward_nn.1} parent=1 // pred_check_branch
      %863 = sbr.rel (0) target = $region33
    $region32: #{feed_forward_nn.1} parent=1 // pred_region
      %s865 = ssub.s32 32, 32
      %866 = vsyncadd [#allocation4], %s865
      %s868 = sshll.u32 [#allocation3], 4
      %s869 = int_to_ptr.vmem [resolvable:$true] %s868
      %871 = dma.vmem_to_hbm [thread:$0]  %s869, 32, %s7, [#allocation4]
    $region33: #{feed_forward_nn.1} parent=1 // pred_fallthru
      _
    // Predicated region
    $region34: #{feed_forward_nn.1} parent=1 // pred_check
      _
    $region35: #{feed_forward_nn.1} parent=1 // pred_check_branch
      %873 = sbr.rel (0) target = $region37
    $region36: #{feed_forward_nn.1} parent=1 // pred_region
      %874 = dma.done [#allocation4], 32
    $region37: #{feed_forward_nn.1} parent=1 // pred_fallthru
      _
    %875 = vsyncpa [#allocation4], 1

</llo_original>
